<compile_context>
chip_gen: v5e
topology: v5e:2x2
jax: 0.10.0
libtpu: 0.0.40
codegen_flags: <defaults>
</compile_context>

<pallas_src>
import jax
import jax.numpy as jnp
from jax.experimental import pallas as pl
from jax.experimental.pallas import tpu as pltpu


# ----------------------------------------------------------------------------
# Kernel
# ----------------------------------------------------------------------------
def highway_kernel(x_ref, w_ref, b_ref, o_ref):
    """One (TM, D) batch tile of the highway forward.

    x_ref : (TM, D)   f32   input tile (tiled over the batch grid axis)
    w_ref : (D, 2D)   bf16  fused [Wg_eff^T | W_eff^T], VMEM-resident
    b_ref : (1, 2D)   f32   fused [bg | b], VMEM-resident
    o_ref : (TM, D)         output tile
    """
    x = x_ref[...]                                     # f32, kept for residual path
    # Single fused matmul on the MXU: bf16 inputs, f32 accumulation.
    acc = jnp.dot(x.astype(jnp.bfloat16), w_ref[...],
                  preferred_element_type=jnp.float32) + b_ref[...]
    d = x.shape[-1]
    t = jax.nn.sigmoid(acc[:, :d])                     # gate branch      (f32)
    h = jnp.maximum(acc[:, d:], 0.0)                   # transform branch (f32)
    # NOTE(v5e micro-opt, only if a bundle dump shows the sigmoid divide on the
    # VALU): t = pl.reciprocal(1.0 + jnp.exp(-acc[:, :d]), approx=True) keeps
    # both the exp and the reciprocal on the EUP slot.
    # highway combine:  t*h + (1-t)*x  ==  x + t*(h - x)   (one fewer VPU op)
    o_ref[...] = (x + t * (h - x)).astype(o_ref.dtype)


# ----------------------------------------------------------------------------
# Wrapper
# ----------------------------------------------------------------------------
def _round_down(x, m):
    return (x // m) * m


def _vmem_ceiling_bytes():
    """Per-generation scoped-VMEM ceiling: physical capacity minus headroom."""
    try:
        cap = int(pltpu.get_tpu_info().vmem_capacity_bytes)
    except Exception:
        cap = 64 << 20                       # conservative: v7x per-TC physical VMEM
    return cap - max(8 << 20, cap // 8)      # ~56 MiB on v7x, ~112 MiB on v5e/v6e


def highway_forward(x, wg_eff, bg, wf_eff, bf_, *, tm=None, out_dtype=None):
    """x: (B, D) f32; wg_eff / wf_eff: (D, D) f32 (out, in); bg / bf_: (D,) f32."""
    B, D = x.shape
    out_dtype = x.dtype if out_dtype is None else jnp.dtype(out_dtype)

    # Fuse the two branches: one (D, 2D) weight (pre-transposed to in x out)
    # and one (1, 2D) bias.  Weights go to bf16 for the MXU; biases stay f32.
    w_cat = jnp.concatenate([wg_eff.T, wf_eff.T], axis=1).astype(jnp.bfloat16)
    b_cat = jnp.concatenate([bg, bf_], axis=0).reshape(1, 2 * D).astype(jnp.float32)

    # ---- VMEM budget -> batch tile size ------------------------------------
    ceiling = _vmem_ceiling_bytes()
    # The pipeliner still double-buffers the "resident" fused weight/bias (2x).
    # TODO(synk): for very large D (~>2K on v7x) mark w/b specs with
    # pipeline_mode=pl.Buffered(1) or add an output-dim grid axis to tile 2D.
    resident = 2 * (D * 2 * D * 2) + 2 * (2 * D * 4)
    slack = 2 << 20
    budget = max(ceiling - resident - slack, 0)
    # Double-buffered x tile + double-buffered out tile, per batch row.
    bytes_per_row = 2 * D * x.dtype.itemsize + 2 * D * out_dtype.itemsize
    tm_target = _round_down(max(budget // bytes_per_row, 8), 8)
    tm_target = min(tm_target, 1024)    # mem-bound roofline saturates ~512-1024 rows
    if tm is not None:
        tm_target = max(8, min(tm_target, _round_down(int(tm), 8)))

    # ---- pick tm: big tiles, but keep >= MIN_STEPS grid steps so each v7x
    # TensorCore (and the single v5e/v6e core) gets >= 2 pipelined steps.
    MIN_STEPS = 4
    if B <= 128:
        tm_sel = B                      # single block (block dim == full dim is legal)
    else:
        tm_sel = max(8, min(tm_target, _round_down(B, 8)))
        steps_cap = _round_down(B // MIN_STEPS, 8)
        if steps_cap >= 128:            # only shrink tiles down to 128 rows for this
            tm_sel = min(tm_sel, steps_cap)
    grid = (pl.cdiv(B, tm_sel),)        # ragged last tile handled by Pallas (no pad copy)

    # ---- scoped-VMEM request (no hard 32 MiB clamp) ------------------------
    vmem_need = (2 * tm_sel * D * x.dtype.itemsize
                 + 2 * tm_sel * D * out_dtype.itemsize
                 + resident + slack)
    vmem_limit = int(min(max(vmem_need, 16 << 20), ceiling))

    out = pl.pallas_call(
        highway_kernel,
        out_shape=jax.ShapeDtypeStruct((B, D), out_dtype),
        grid=grid,
        in_specs=[
            pl.BlockSpec((tm_sel, D), lambda i: (i, 0)),   # x: tiled over batch
            pl.BlockSpec((D, 2 * D), lambda i: (0, 0)),    # fused weight, resident
            pl.BlockSpec((1, 2 * D), lambda i: (0, 0)),    # fused bias, resident
        ],
        out_specs=pl.BlockSpec((tm_sel, D), lambda i: (i, 0)),
        compiler_params=pltpu.CompilerParams(
            dimension_semantics=("parallel",),             # shards steps across v7x TCs
            vmem_limit_bytes=vmem_limit,
        ),
    )(x, w_cat, b_cat)
    return out


# ----------------------------------------------------------------------------
# weight_norm parameter setup (plain JAX; matches PyTorch weight_norm(dim=None))
# ----------------------------------------------------------------------------
def make_weight_norm_params(key, in_size, out_size):
    """Deterministic weight_norm(Linear) params: v (out, in), scalar g, bias (out,)."""
    kv, kb = jax.random.split(key)
    bound = 1.0 / jnp.sqrt(jnp.asarray(in_size, jnp.float32))
    v = jax.random.uniform(kv, (out_size, in_size), jnp.float32, -bound, bound)
    g = jnp.linalg.norm(v)              # PyTorch init: g = ||v||_F for dim=None
    b = jax.random.uniform(kb, (out_size,), jnp.float32, -bound, bound)
    return v, g, b


def effective_weight(v, g):
    # weight_norm(dim=None):  W = g * v / ||v||_F
    return (g / jnp.linalg.norm(v)) * v


def highway_reference_bf16(x, wg_eff, bg, wf_eff, bf_):
    """Reference with identical bf16-matmul math (tight tolerance)."""
    D = x.shape[-1]
    w_cat = jnp.concatenate([wg_eff.T, wf_eff.T], axis=1).astype(jnp.bfloat16)
    b_cat = jnp.concatenate([bg, bf_], axis=0).reshape(1, 2 * D).astype(jnp.float32)
    acc = jnp.dot(x.astype(jnp.bfloat16), w_cat,
                  preferred_element_type=jnp.float32) + b_cat
    t = jax.nn.sigmoid(acc[:, :D])
    h = jnp.maximum(acc[:, D:], 0.0)
    return x + t * (h - x)


if __name__ == "__main__":
    key = jax.random.PRNGKey(0)
    k_x, k_gate, k_fc = jax.random.split(key, 3)

    # TODO(synk): the `monitor` TensorBoard-histogram hook in forward() is
    # host-side logging and has no Pallas equivalent; it is omitted.
    input_size = 128                                   # lane-aligned hidden size
    vg, gg, bg = make_weight_norm_params(k_gate, input_size, input_size)
    vf, gf, bf_ = make_weight_norm_params(k_fc, input_size, input_size)
    wg_eff = effective_weight(vg, gg)                  # (out, in)
    wf_eff = effective_weight(vf, gf)                  # (out, in)

    # Three batch sizes: multi-step grid (>=2 steps/TC on v7x), ragged last
    # tile without any wrapper-side pad, and a tiny single-block case.
    for batch in (1024, 600, 100):
        kx = jax.random.fold_in(k_x, batch)
        x = jax.random.normal(kx, (batch, input_size), jnp.float32)

        out = jax.block_until_ready(highway_forward(x, wg_eff, bg, wf_eff, bf_))
        assert out.shape == x.shape and out.dtype == x.dtype

        # --- reference 1: identical bf16-matmul math (tight tolerance) ---
        ref_bf16 = highway_reference_bf16(x, wg_eff, bg, wf_eff, bf_)
        assert jnp.allclose(out, ref_bf16, atol=1e-4, rtol=1e-4), \
            f"B={batch}: mismatch vs bf16-matched reference"

        # --- reference 2: full-f32 module semantics (loose tol for bf16 MXU) ---
        act = x @ wg_eff.T + bg
        t = jax.nn.sigmoid(act)
        h = jnp.maximum(x @ wf_eff.T + bf_, 0.0)
        ref_f32 = t * h + (1.0 - t) * x
        assert jnp.allclose(out, ref_f32, atol=3e-2, rtol=3e-2), \
            f"B={batch}: mismatch vs f32 reference"

    print("KERNEL_OK")
</pallas_src>

<mosaic_0001>
module attributes {stable_mosaic.version = 11 : i64} {
  func.func @highway_kernel(%arg0: i32, %arg1: memref<256x128xf32, #tpu.memory_space<vmem>>, %arg2: memref<128x256xbf16, #tpu.memory_space<vmem>>, %arg3: memref<1x256xf32, #tpu.memory_space<vmem>>, %arg4: memref<256x128xf32, #tpu.memory_space<vmem>>) attributes {dimension_semantics = [#tpu.dimension_semantics<parallel>], iteration_bounds = array<i64: 4>, scalar_prefetch = 0 : i64, scratch_operands = 0 : i64, tpu.core_type = #tpu.core_type<tc>, window_params = [{transform_indices = @transform_0, window_bounds = array<i64: 256, 128>}, {pipeline_mode = #tpu.pipeline_mode<synchronous>, transform_indices = @transform_1, window_bounds = array<i64: 128, 256>}, {pipeline_mode = #tpu.pipeline_mode<synchronous>, transform_indices = @transform_2, window_bounds = array<i64: 1, 256>}, {transform_indices = @transform_3, window_bounds = array<i64: 256, 128>}]} {
    %c0 = arith.constant 0 : index
    %c0_0 = arith.constant 0 : index
    %0 = vector.load %arg1[%c0, %c0_0] : memref<256x128xf32, #tpu.memory_space<vmem>>, vector<256x128xf32>
    %1 = arith.truncf %0 : vector<256x128xf32> to vector<256x128xbf16>
    %c0_1 = arith.constant 0 : index
    %c0_2 = arith.constant 0 : index
    %2 = vector.load %arg2[%c0_1, %c0_2] : memref<128x256xbf16, #tpu.memory_space<vmem>>, vector<128x256xbf16>
    %cst = arith.constant dense<0.000000e+00> : vector<256x256xf32>
    %3 = tpu.matmul %1, %2, %cst {dimension_numbers = #tpu.dot_dimension_numbers<[1], [0], [0], [1], [0, 0, 1, 1], [], []>} : vector<256x128xbf16>, vector<128x256xbf16>, vector<256x256xf32> -> vector<256x256xf32>
    %c0_3 = arith.constant 0 : index
    %c0_4 = arith.constant 0 : index
    %4 = vector.load %arg3[%c0_3, %c0_4] : memref<1x256xf32, #tpu.memory_space<vmem>>, vector<1x256xf32>
    %5 = vector.broadcast %4 : vector<1x256xf32> to vector<256x256xf32>
    %6 = arith.addf %3, %5 : vector<256x256xf32>
    %7 = vector.extract_strided_slice %6 {offsets = [0, 0], sizes = [256, 128], strides = [1, 1]} : vector<256x256xf32> to vector<256x128xf32>
    %8 = arith.negf %7 : vector<256x128xf32>
    %9 = math.exp %8 : vector<256x128xf32>
    %cst_5 = arith.constant 1.000000e+00 : f32
    %10 = vector.broadcast %cst_5 : f32 to vector<256x128xf32>
    %11 = arith.addf %10, %9 : vector<256x128xf32>
    %12 = arith.divf %10, %11 : vector<256x128xf32>
    %13 = vector.extract_strided_slice %6 {offsets = [0, 128], sizes = [256, 128], strides = [1, 1]} : vector<256x256xf32> to vector<256x128xf32>
    %cst_6 = arith.constant 0.000000e+00 : f32
    %14 = vector.broadcast %cst_6 : f32 to vector<256x128xf32>
    %15 = arith.maximumf %13, %14 : vector<256x128xf32>
    %16 = arith.subf %15, %0 : vector<256x128xf32>
    %17 = arith.mulf %12, %16 : vector<256x128xf32>
    %18 = arith.addf %0, %17 : vector<256x128xf32>
    %c0_7 = arith.constant 0 : index
    %c0_8 = arith.constant 0 : index
    %19 = vector.load %arg4[%c0_7, %c0_8] : memref<256x128xf32, #tpu.memory_space<vmem>>, vector<256x128xf32>
    tpu.vector_store %arg4[%c0_7, %c0_8], %18 {strides = array<i32>} : memref<256x128xf32, #tpu.memory_space<vmem>>, vector<256x128xf32>,
    return
  }
  func.func @transform_0(%arg0: i32) -> (i32, i32) {
    %c0_i32 = arith.constant 0 : i32
    %c0_i32_0 = arith.constant 0 : i32
    return %arg0, %c0_i32 : i32, i32
  }
  func.func @transform_1(%arg0: i32) -> (i32, i32) {
    %c0_i32 = arith.constant 0 : i32
    %c0_i32_0 = arith.constant 0 : i32
    %c0_i32_1 = arith.constant 0 : i32
    return %c0_i32, %c0_i32_0 : i32, i32
  }
  func.func @transform_2(%arg0: i32) -> (i32, i32) {
    %c0_i32 = arith.constant 0 : i32
    %c0_i32_0 = arith.constant 0 : i32
    %c0_i32_1 = arith.constant 0 : i32
    return %c0_i32, %c0_i32_0 : i32, i32
  }
  func.func @transform_3(%arg0: i32) -> (i32, i32) {
    %c0_i32 = arith.constant 0 : i32
    %c0_i32_0 = arith.constant 0 : i32
    return %arg0, %c0_i32 : i32, i32
  }
}

</mosaic_0001>

<llo_original>
// kernel: tpu_custom_call.1
$region0: #{tpu_custom_call.1}
  #allocation0 [shape = 'u32[]', space=smem, size = 0x4, offset = 0x4, fixed_abs, tag = 'smem constant byte address 0x4 - core index']
  #allocation1 [shape = 'u32[72,128]{1,0:T(1,128)}', space=vmem, size = 0x9000, scoped, tag = 'internal scratch']
  %s0 = inlined_call_operand.hbm [shape: f32[1024,128], index: 0, kind: input, shape index: {}]
  %s1 = inlined_call_operand.hbm [shape: bf16[128,256], index: 1, kind: input, shape index: {}]
  %s2 = inlined_call_operand.hbm [shape: f32[1,256], index: 2, kind: input, shape index: {}]
  %s3 = inlined_call_operand.hbm [shape: f32[1024,128], index: 3, kind: output, shape index: {}]
  %s4 = sld [smem:[#allocation0]]
  $region57: #{tpu_custom_call.1} parent=0
    _
  %s6 = ssub.s32 1, %s4
  %s7 = scalar_select 0, %s6, %s4
  $region1: #{tpu_custom_call.1} parent=0
    #allocation2 [shape = 'u8[262144]{0}', space=vmem, size = 0x40000, scoped, tag = 'input window, operand 0']
    #allocation3 [shape = 's32[2]{0}', space=sflag, size = 0x8, scoped, tag = 'scoped memory for tpu_custom_call.1']
    #allocation4 [shape = 's32[2]{0}', space=sflag, size = 0x8, scoped, tag = 'scoped memory for tpu_custom_call.1']
    #allocation5 [shape = 'u8[65536]{0}', space=vmem, size = 0x10000, scoped, tag = 'input window, operand 1, single buffered']
    #allocation6 [shape = 's32[1]{0}', space=sflag, size = 0x4, scoped, tag = 'scoped memory for tpu_custom_call.1']
    #allocation7 [shape = 'u8[1024]{0}', space=vmem, size = 0x400, scoped, tag = 'input window, operand 2, single buffered']
    #allocation8 [shape = 'u8[262144]{0}', space=vmem, size = 0x40000, scoped, tag = 'output window, operand 0']
    %8 = vsyncpa [#allocation3], 0
    %s9 = scalar_lea.sflag [#allocation3], 1
    %10 = vsyncpa %s9, 0
    %11 = vsyncpa [#allocation6], 0
    %12 = vsyncpa [#allocation4], 0
    %s13 = scalar_lea.sflag [#allocation4], 1
    %14 = vsyncpa %s13, 0
    loop: start=0, step=1, limit=6
    $region2: #{tpu_custom_call.1} parent=1 // loop_pre_header
      _
    $region3: #{tpu_custom_call.1} parent=1 // loop_header
      %s16 = sphi 0, %s20
      %p17 = scmp.ge.s32.totalorder %s16, 6
      %s26 = sphi 0, %s28
      %s29 = sphi 0, %s26
      %s30 = sphi 0, %s29
      %s46 = sphi 0, %s30
      %s50 = sphi 0, %s50
      %s52 = sphi 0, %s50
      %s53 = sphi 0, %s52
      %s67 = sphi 0, %s53
      %s71 = sphi 0, %s71
      %s73 = sphi 0, %s71
      %s74 = sphi 0, %s73
      %s88 = sphi 0, %s74
      %s94 = sphi 0, %s96
      %s97 = sphi 0, %s94
      %s98 = sphi 0, %s97
      %s114 = sphi 0, %s98
    $region4: #{tpu_custom_call.1} parent=1 // loop_header_branch
      %19 = sbr.rel (%p17) target = $region8
    $region5: #{tpu_custom_call.1} parent=1 // loop_body
      %s21 = ssub.s32 %s16, 1
      %s22 = ssub.s32 %s16, 2
      %s23 = sadd.s32 %s16, 1
      %s24 = ssub.s32 %s16, %s23
      %p25 = scmp.eq.s32.totalorder %s24, 0
      %s27 = sadd.s32 %s26, 1
      %s28 = scalar_select %p25, %s26, %s27
      %p31 = pneg %p25
      %p32 = scmp.eq.s32.totalorder %s16, 3
      %p33 = por %p31, %p32
      %p34 = scmp.ne.s32.totalorder %s26, %s29
      %p35 = scmp.eq.s32.totalorder %s16, 0
      %p36 = por %p34, %p35
      %p37 = scmp.ne.s32.totalorder %s26, %s29
      %p38 = scmp.eq.s32.totalorder %s21, 3
      %p39 = por %p37, %p38
      %p40 = scmp.ne.s32.totalorder %s29, %s30
      %p41 = scmp.eq.s32.totalorder %s21, 0
      %p42 = por %p40, %p41
      %p43 = scmp.ne.s32.totalorder %s29, %s30
      %p44 = scmp.eq.s32.totalorder %s22, 3
      %p45 = por %p43, %p44
      %p47 = scmp.ne.s32.totalorder %s30, %s46
      %p48 = scmp.eq.s32.totalorder %s22, 0
      %p49 = por %p47, %p48
      %s51 = sadd.s32 %s50, 1
      %p54 = scmp.eq.s32.totalorder %s16, 3
      %p55 = scmp.ne.s32.totalorder %s50, %s52
      %p56 = scmp.eq.s32.totalorder %s16, 0
      %p57 = por %p55, %p56
      %p58 = scmp.ne.s32.totalorder %s50, %s52
      %p59 = scmp.eq.s32.totalorder %s21, 3
      %p60 = por %p58, %p59
      %p61 = scmp.ne.s32.totalorder %s52, %s53
      %p62 = scmp.eq.s32.totalorder %s21, 0
      %p63 = por %p61, %p62
      %p64 = scmp.ne.s32.totalorder %s52, %s53
      %p65 = scmp.eq.s32.totalorder %s22, 3
      %p66 = por %p64, %p65
      %p68 = scmp.ne.s32.totalorder %s53, %s67
      %p69 = scmp.eq.s32.totalorder %s22, 0
      %p70 = por %p68, %p69
      %s72 = sadd.s32 %s71, 1
      %p75 = scmp.eq.s32.totalorder %s16, 3
      %p76 = scmp.ne.s32.totalorder %s71, %s73
      %p77 = scmp.eq.s32.totalorder %s16, 0
      %p78 = por %p76, %p77
      %p79 = scmp.ne.s32.totalorder %s71, %s73
      %p80 = scmp.eq.s32.totalorder %s21, 3
      %p81 = por %p79, %p80
      %p82 = scmp.ne.s32.totalorder %s73, %s74
      %p83 = scmp.eq.s32.totalorder %s21, 0
      %p84 = por %p82, %p83
      %p85 = scmp.ne.s32.totalorder %s73, %s74
      %p86 = scmp.eq.s32.totalorder %s22, 3
      %p87 = por %p85, %p86
      %p89 = scmp.ne.s32.totalorder %s74, %s88
      %p90 = scmp.eq.s32.totalorder %s22, 0
      %p91 = por %p89, %p90
      %s92 = ssub.s32 %s16, %s23
      %p93 = scmp.eq.s32.totalorder %s92, 0
      %s95 = sadd.s32 %s94, 1
      %s96 = scalar_select %p93, %s94, %s95
      %p99 = pneg %p93
      %p100 = scmp.eq.s32.totalorder %s16, 3
      %p101 = por %p99, %p100
      %p102 = scmp.ne.s32.totalorder %s94, %s97
      %p103 = scmp.eq.s32.totalorder %s16, 0
      %p104 = por %p102, %p103
      %p105 = scmp.ne.s32.totalorder %s94, %s97
      %p106 = scmp.eq.s32.totalorder %s21, 3
      %p107 = por %p105, %p106
      %p108 = scmp.ne.s32.totalorder %s97, %s98
      %p109 = scmp.eq.s32.totalorder %s21, 0
      %p110 = por %p108, %p109
      %p111 = scmp.ne.s32.totalorder %s97, %s98
      %p112 = scmp.eq.s32.totalorder %s22, 3
      %p113 = por %p111, %p112
      %p115 = scmp.ne.s32.totalorder %s98, %s114
      %p116 = scmp.eq.s32.totalorder %s22, 0
      %p117 = por %p115, %p116
      %p118 = scmp.le.s32.totalorder 1, %s16
      %p119 = scmp.lt.s32.totalorder %s16, 5
      %p120 = pnand %p118, %p119
      %p121 = pneg %p120
      // Predicated region
      $region9: #{tpu_custom_call.1} parent=5 // pred_check
        _
      $region10: #{tpu_custom_call.1} parent=5 // pred_check_branch
        %123 = sbr.rel (%p120) target = $region12
      $region11: #{tpu_custom_call.1} parent=5 // pred_region
        %s124 = ssub.s32 %s16, 1
        // Predicated region
        $region13: #{tpu_custom_call.1} parent=11 // pred_check
          %p125 = pneg %p63
        $region14: #{tpu_custom_call.1} parent=11 // pred_check_branch
          %127 = sbr.rel (%p125) target = $region16
        $region15: #{tpu_custom_call.1} parent=11 // pred_region
          %129 = vsyncadd [#allocation6], 0
          %s130 = sshll.u32 %s1, 4
          %s131 = int_to_ptr.hbm [resolvable:$true] %s130
          %s132 = sshll.u32 [#allocation5], 4
          %s133 = int_to_ptr.vmem [resolvable:$true] %s132
          %138 = dma.hbm_to_vmem [thread:$0]  %s131, 2048, %s133, [#allocation6], 128, 128, 8
        $region16: #{tpu_custom_call.1} parent=11 // pred_fallthru
          _
        // Predicated region
        $region17: #{tpu_custom_call.1} parent=11 // pred_check
          %p139 = pneg %p84
        $region18: #{tpu_custom_call.1} parent=11 // pred_check_branch
          %141 = sbr.rel (%p139) target = $region20
        $region19: #{tpu_custom_call.1} parent=11 // pred_region
          %143 = vsyncadd [#allocation6], 0
          %s145 = sshll.u32 %s2, 4
          %s146 = int_to_ptr.hbm [resolvable:$true] %s145
          %s147 = sshll.u32 [#allocation7], 4
          %s148 = int_to_ptr.vmem [resolvable:$true] %s147
          %150 = dma.hbm_to_vmem [thread:$0]  %s146, 32, %s148, [#allocation6]
        $region20: #{tpu_custom_call.1} parent=11 // pred_fallthru
          _
      $region12: #{tpu_custom_call.1} parent=5 // pred_fallthru
        _
      %p151 = scmp.lt.s32.totalorder %s16, 4
      // Predicated region
      $region21: #{tpu_custom_call.1} parent=5 // pred_check
        %p152 = pneg %p151
      $region22: #{tpu_custom_call.1} parent=5 // pred_check_branch
        %154 = sbr.rel (%p152) target = $region24
      $region23: #{tpu_custom_call.1} parent=5 // pred_region
        // Predicated region
        $region25: #{tpu_custom_call.1} parent=23 // pred_check
          %p155 = pneg %p36
        $region26: #{tpu_custom_call.1} parent=23 // pred_check_branch
          %157 = sbr.rel (%p155) target = $region28
        $region27: #{tpu_custom_call.1} parent=23 // pred_region
          %s158 = sand.u32 %s26, 1
          %s159 = scalar_lea.sflag [#allocation3], %s158
          %s160 = sand.u32 %s26, 1
          %s161 = smul.addr %s160, 256
          %s162 = scalar_lea.vmem [#allocation2], %s161
          %s163 = smul.u32 32, %s16
          %165 = vsyncadd %s159, 0
          %s166 = smul.addr %s163, 8
          %s167 = scalar_lea.hbm %s0, %s166
          %s168 = sshll.u32 %s167, 4
          %s169 = int_to_ptr.hbm [resolvable:$true] %s168
          %s170 = sshll.u32 %s162, 4
          %s171 = int_to_ptr.vmem [resolvable:$true] %s170
          %176 = dma.hbm_to_vmem [thread:$0]  %s169, 4096, %s171, %s159, 128, 128, 8
        $region28: #{tpu_custom_call.1} parent=23 // pred_fallthru
          _
      $region24: #{tpu_custom_call.1} parent=5 // pred_fallthru
        _
      %p177 = scmp.le.s32.totalorder 1, %s16
      %p178 = scmp.lt.s32.totalorder %s16, 5
      %p179 = pnand %p177, %p178
      %p180 = pneg %p179
      // Predicated region
      $region29: #{tpu_custom_call.1} parent=5 // pred_check
        _
      $region30: #{tpu_custom_call.1} parent=5 // pred_check_branch
        %182 = sbr.rel (%p179) target = $region32
      $region31: #{tpu_custom_call.1} parent=5 // pred_region
        %s183 = ssub.s32 %s16, 1
        %s184 = sand.u32 %s29, 1
        %s185 = scalar_lea.sflag [#allocation3], %s184
        %s186 = sand.u32 %s29, 1
        %s187 = smul.addr %s186, 256
        %s188 = scalar_lea.vmem [#allocation2], %s187
        // Predicated region
        $region33: #{tpu_custom_call.1} parent=31 // pred_check
          %p189 = pneg %p42
        $region34: #{tpu_custom_call.1} parent=31 // pred_check_branch
          %191 = sbr.rel (%p189) target = $region36
        $region35: #{tpu_custom_call.1} parent=31 // pred_region
          %193 = dma.done %s185, 4096
        $region36: #{tpu_custom_call.1} parent=31 // pred_fallthru
          _
        // Predicated region
        $region37: #{tpu_custom_call.1} parent=31 // pred_check
          %p194 = pneg %p63
        $region38: #{tpu_custom_call.1} parent=31 // pred_check_branch
          %196 = sbr.rel (%p194) target = $region40
        $region39: #{tpu_custom_call.1} parent=31 // pred_region
          %198 = dma.done [#allocation6], 2048
        $region40: #{tpu_custom_call.1} parent=31 // pred_fallthru
          _
        // Predicated region
        $region41: #{tpu_custom_call.1} parent=31 // pred_check
          %p199 = pneg %p84
        $region42: #{tpu_custom_call.1} parent=31 // pred_check_branch
          %201 = sbr.rel (%p199) target = $region44
        $region43: #{tpu_custom_call.1} parent=31 // pred_region
          %203 = dma.done [#allocation6], 32
        $region44: #{tpu_custom_call.1} parent=31 // pred_fallthru
          _
        %s204 = sand.u32 %s29, 1
        %s205 = scalar_lea.sflag [#allocation3], %s204
        %s206 = sand.u32 %s29, 1
        %s207 = smul.addr %s206, 256
        %s208 = scalar_lea.vmem [#allocation2], %s207
        %p209 = pneg %p42
        %p210 = pneg %p39
        %p211 = pneg %p63
        %p212 = pneg %p60
        %p213 = pneg %p84
        %p214 = pneg %p81
        %p215 = pneg %p110
        %p216 = pneg %p107
        %s217 = sand.u32 %s97, 1
        %s218 = scalar_lea.sflag [#allocation4], %s217
        %s219 = sand.u32 %s97, 1
        %s220 = smul.addr %s219, 256
        %s221 = scalar_lea.vmem [#allocation8], %s220
        %s222 = smul.u32 32, %s21
        %s223 = smul.u32 32, %s21
        %v224 = vld [vmem:[%s188] sm:$0xff]
        %v225 = vld [vmem:[%s188 + $0x8] sm:$0xff]
        %v226 = vld [vmem:[%s188 + $0x10] sm:$0xff]
        %v227 = vld [vmem:[%s188 + $0x18] sm:$0xff]
        %v228 = vld [vmem:[%s188 + $0x20] sm:$0xff]
        %v229 = vld [vmem:[%s188 + $0x28] sm:$0xff]
        %v230 = vld [vmem:[%s188 + $0x30] sm:$0xff]
        %v231 = vld [vmem:[%s188 + $0x38] sm:$0xff]
        %v232 = vld [vmem:[%s188 + $0x40] sm:$0xff]
        %v233 = vld [vmem:[%s188 + $0x48] sm:$0xff]
        %v234 = vld [vmem:[%s188 + $0x50] sm:$0xff]
        %v235 = vld [vmem:[%s188 + $0x58] sm:$0xff]
        %v236 = vld [vmem:[%s188 + $0x60] sm:$0xff]
        %v237 = vld [vmem:[%s188 + $0x68] sm:$0xff]
        %v238 = vld [vmem:[%s188 + $0x70] sm:$0xff]
        %v239 = vld [vmem:[%s188 + $0x78] sm:$0xff]
        %v240 = vld [vmem:[%s188 + $0x80] sm:$0xff]
        %v241 = vld [vmem:[%s188 + $0x88] sm:$0xff]
        %v242 = vld [vmem:[%s188 + $0x90] sm:$0xff]
        %v243 = vld [vmem:[%s188 + $0x98] sm:$0xff]
        %v244 = vld [vmem:[%s188 + $0xa0] sm:$0xff]
        %v245 = vld [vmem:[%s188 + $0xa8] sm:$0xff]
        %v246 = vld [vmem:[%s188 + $0xb0] sm:$0xff]
        %v247 = vld [vmem:[%s188 + $0xb8] sm:$0xff]
        %v248 = vld [vmem:[%s188 + $0xc0] sm:$0xff]
        %v249 = vld [vmem:[%s188 + $0xc8] sm:$0xff]
        %v250 = vld [vmem:[%s188 + $0xd0] sm:$0xff]
        %v251 = vld [vmem:[%s188 + $0xd8] sm:$0xff]
        %v252 = vld [vmem:[%s188 + $0xe0] sm:$0xff]
        %v253 = vld [vmem:[%s188 + $0xe8] sm:$0xff]
        %v254 = vld [vmem:[%s188 + $0xf0] sm:$0xff]
        %v255 = vld [vmem:[%s188 + $0xf8] sm:$0xff]
        %v256 = vpack.c.bf16 %v225, %v224
        %v257 = vpack.c.bf16 %v227, %v226
        %v258 = vpack.c.bf16 %v229, %v228
        %v259 = vpack.c.bf16 %v231, %v230
        %v260 = vpack.c.bf16 %v233, %v232
        %v261 = vpack.c.bf16 %v235, %v234
        %v262 = vpack.c.bf16 %v237, %v236
        %v263 = vpack.c.bf16 %v239, %v238
        %v264 = vpack.c.bf16 %v241, %v240
        %v265 = vpack.c.bf16 %v243, %v242
        %v266 = vpack.c.bf16 %v245, %v244
        %v267 = vpack.c.bf16 %v247, %v246
        %v268 = vpack.c.bf16 %v249, %v248
        %v269 = vpack.c.bf16 %v251, %v250
        %v270 = vpack.c.bf16 %v253, %v252
        %v271 = vpack.c.bf16 %v255, %v254
        %v272 = vld [vmem:[#allocation5] sm:$0xff]
        %v273 = vld [vmem:[#allocation5 + $0x8] sm:$0xff]
        %v274 = vld [vmem:[#allocation5 + $0x10] sm:$0xff]
        %v275 = vld [vmem:[#allocation5 + $0x18] sm:$0xff]
        %v276 = vld [vmem:[#allocation5 + $0x20] sm:$0xff]
        %v277 = vld [vmem:[#allocation5 + $0x28] sm:$0xff]
        %v278 = vld [vmem:[#allocation5 + $0x30] sm:$0xff]
        %v279 = vld [vmem:[#allocation5 + $0x38] sm:$0xff]
        %v280 = vld [vmem:[#allocation5 + $0x40] sm:$0xff]
        %v281 = vld [vmem:[#allocation5 + $0x48] sm:$0xff]
        %v282 = vld [vmem:[#allocation5 + $0x50] sm:$0xff]
        %v283 = vld [vmem:[#allocation5 + $0x58] sm:$0xff]
        %v284 = vld [vmem:[#allocation5 + $0x60] sm:$0xff]
        %v285 = vld [vmem:[#allocation5 + $0x68] sm:$0xff]
        %v286 = vld [vmem:[#allocation5 + $0x70] sm:$0xff]
        %v287 = vld [vmem:[#allocation5 + $0x78] sm:$0xff]
        %v288 = vld [vmem:[#allocation7] sm:$0x3]
        %v290 = vperm.slane %v288, 0
        %v291 = vperm.slane %v288, 1
        %v310 = vunpack.c.l.b16 %v272
        %v311 = vunpack.c.h.b16 %v272
        %v312 = vunpack.c.l.b16 %v273
        %v313 = vunpack.c.h.b16 %v273
        %v314 = vunpack.c.l.b16 %v274
        %v315 = vunpack.c.h.b16 %v274
        %v316 = vunpack.c.l.b16 %v275
        %v317 = vunpack.c.h.b16 %v275
        %v318 = vunpack.c.l.b16 %v276
        %v319 = vunpack.c.h.b16 %v276
        %v320 = vunpack.c.l.b16 %v277
        %v321 = vunpack.c.h.b16 %v277
        %v322 = vunpack.c.l.b16 %v278
        %v323 = vunpack.c.h.b16 %v278
        %v324 = vunpack.c.l.b16 %v279
        %v325 = vunpack.c.h.b16 %v279
        %v326 = vunpack.c.l.b16 %v280
        %v327 = vunpack.c.h.b16 %v280
        %v328 = vunpack.c.l.b16 %v281
        %v329 = vunpack.c.h.b16 %v281
        %v330 = vunpack.c.l.b16 %v282
        %v331 = vunpack.c.h.b16 %v282
        %v332 = vunpack.c.l.b16 %v283
        %v333 = vunpack.c.h.b16 %v283
        %v334 = vunpack.c.l.b16 %v284
        %v335 = vunpack.c.h.b16 %v284
        %v336 = vunpack.c.l.b16 %v285
        %v337 = vunpack.c.h.b16 %v285
        %v338 = vunpack.c.l.b16 %v286
        %v339 = vunpack.c.h.b16 %v286
        %v340 = vunpack.c.l.b16 %v287
        %v341 = vunpack.c.h.b16 %v287
        %v342 = vpack.c.b16 %v312, %v310
        %v343 = vpack.c.b16 %v313, %v311
        %v344 = vpack.c.b16 %v316, %v314
        %v345 = vpack.c.b16 %v317, %v315
        %v346 = vpack.c.b16 %v320, %v318
        %v347 = vpack.c.b16 %v321, %v319
        %v348 = vpack.c.b16 %v324, %v322
        %v349 = vpack.c.b16 %v325, %v323
        %v350 = vpack.c.b16 %v328, %v326
        %v351 = vpack.c.b16 %v329, %v327
        %v352 = vpack.c.b16 %v332, %v330
        %v353 = vpack.c.b16 %v333, %v331
        %v354 = vpack.c.b16 %v336, %v334
        %v355 = vpack.c.b16 %v337, %v335
        %v356 = vpack.c.b16 %v340, %v338
        %v357 = vpack.c.b16 %v341, %v339
        %374 = vmatpush.bf16.msra.mxu0 %v356
        %375 = vmatpush.bf16.msra.mxu0 %v354
        %376 = vmatpush.bf16.msra.mxu0 %v352
        %377 = vmatpush.bf16.msra.mxu0 %v350
        %378 = vmatpush.bf16.msra.mxu0 %v348
        %379 = vmatpush.bf16.msra.mxu0 %v346
        %380 = vmatpush.bf16.msra.mxu0 %v344
        %381 = vmatpush.bf16.msra.mxu0 %v342
        %382 = vmatmul.bf16.gmra.mxu0 %v256
        %v383 = vpop.f32.mrf.mxu0
        %v384 = vadd.f32 %v290, %v383
        %v385 = vpop.f32.mrf.mxu0
        %v386 = vadd.f32 %v290, %v385
        %387 = vmatmul.bf16.gmra.mxu0 %v257
        %v388 = vpop.f32.mrf.mxu0
        %v389 = vadd.f32 %v290, %v388
        %v390 = vpop.f32.mrf.mxu0
        %v391 = vadd.f32 %v290, %v390
        %392 = vmatmul.bf16.gmra.mxu0 %v258
        %v393 = vpop.f32.mrf.mxu0
        %v394 = vadd.f32 %v290, %v393
        %v395 = vpop.f32.mrf.mxu0
        %v396 = vadd.f32 %v290, %v395
        %397 = vmatmul.bf16.gmra.mxu0 %v259
        %v398 = vpop.f32.mrf.mxu0
        %v399 = vadd.f32 %v290, %v398
        %v400 = vpop.f32.mrf.mxu0
        %v401 = vadd.f32 %v290, %v400
        %402 = vmatmul.bf16.gmra.mxu0 %v260
        %v403 = vpop.f32.mrf.mxu0
        %v404 = vadd.f32 %v290, %v403
        %v405 = vpop.f32.mrf.mxu0
        %v406 = vadd.f32 %v290, %v405
        %407 = vmatmul.bf16.gmra.mxu0 %v261
        %v408 = vpop.f32.mrf.mxu0
        %v409 = vadd.f32 %v290, %v408
        %v410 = vpop.f32.mrf.mxu0
        %v411 = vadd.f32 %v290, %v410
        %412 = vmatmul.bf16.gmra.mxu0 %v262
        %v413 = vpop.f32.mrf.mxu0
        %v414 = vadd.f32 %v290, %v413
        %v415 = vpop.f32.mrf.mxu0
        %v416 = vadd.f32 %v290, %v415
        %417 = vmatmul.bf16.gmra.mxu0 %v263
        %v418 = vpop.f32.mrf.mxu0
        %v419 = vadd.f32 %v290, %v418
        %v420 = vpop.f32.mrf.mxu0
        %v421 = vadd.f32 %v290, %v420
        %422 = vmatmul.bf16.gmra.mxu0 %v264
        %v423 = vpop.f32.mrf.mxu0
        %v424 = vadd.f32 %v290, %v423
        %v425 = vpop.f32.mrf.mxu0
        %v426 = vadd.f32 %v290, %v425
        %427 = vmatmul.bf16.gmra.mxu0 %v265
        %v428 = vpop.f32.mrf.mxu0
        %v429 = vadd.f32 %v290, %v428
        %v430 = vpop.f32.mrf.mxu0
        %v431 = vadd.f32 %v290, %v430
        %432 = vmatmul.bf16.gmra.mxu0 %v266
        %v433 = vpop.f32.mrf.mxu0
        %v434 = vadd.f32 %v290, %v433
        %v435 = vpop.f32.mrf.mxu0
        %v436 = vadd.f32 %v290, %v435
        %437 = vmatmul.bf16.gmra.mxu0 %v267
        %v438 = vpop.f32.mrf.mxu0
        %v439 = vadd.f32 %v290, %v438
        %v440 = vpop.f32.mrf.mxu0
        %v441 = vadd.f32 %v290, %v440
        %442 = vmatmul.bf16.gmra.mxu0 %v268
        %v443 = vpop.f32.mrf.mxu0
        %v444 = vadd.f32 %v290, %v443
        %v445 = vpop.f32.mrf.mxu0
        %v446 = vadd.f32 %v290, %v445
        %447 = vmatmul.bf16.gmra.mxu0 %v269
        %v448 = vpop.f32.mrf.mxu0
        %v449 = vadd.f32 %v290, %v448
        %v450 = vpop.f32.mrf.mxu0
        %v451 = vadd.f32 %v290, %v450
        %452 = vmatmul.bf16.gmra.mxu0 %v270
        %v453 = vpop.f32.mrf.mxu0
        %v454 = vadd.f32 %v290, %v453
        %v455 = vpop.f32.mrf.mxu0
        %v456 = vadd.f32 %v290, %v455
        %457 = vmatmul.bf16.gmra.mxu0 %v271
        %v458 = vpop.f32.mrf.mxu0
        %v459 = vadd.f32 %v290, %v458
        %v460 = vpop.f32.mrf.mxu0
        %v461 = vadd.f32 %v290, %v460
        %462 = vdwg.mxu0
        %463 = vmatpush.bf16.msra.mxu0 %v357
        %464 = vmatpush.bf16.msra.mxu0 %v355
        %465 = vmatpush.bf16.msra.mxu0 %v353
        %466 = vmatpush.bf16.msra.mxu0 %v351
        %467 = vmatpush.bf16.msra.mxu0 %v349
        %468 = vmatpush.bf16.msra.mxu0 %v347
        %469 = vmatpush.bf16.msra.mxu0 %v345
        %470 = vmatpush.bf16.msra.mxu0 %v343
        %471 = vmatmul.bf16.gmra.mxu0 %v256
        %v472 = vpop.f32.mrf.mxu0
        %v473 = vadd.f32 %v291, %v472
        %v474 = vpop.f32.mrf.mxu0
        %v475 = vadd.f32 %v291, %v474
        %476 = vmatmul.bf16.gmra.mxu0 %v257
        %v477 = vpop.f32.mrf.mxu0
        %v478 = vadd.f32 %v291, %v477
        %v479 = vpop.f32.mrf.mxu0
        %v480 = vadd.f32 %v291, %v479
        %481 = vmatmul.bf16.gmra.mxu0 %v258
        %v482 = vpop.f32.mrf.mxu0
        %v483 = vadd.f32 %v291, %v482
        %v484 = vpop.f32.mrf.mxu0
        %v485 = vadd.f32 %v291, %v484
        %486 = vmatmul.bf16.gmra.mxu0 %v259
        %v487 = vpop.f32.mrf.mxu0
        %v488 = vadd.f32 %v291, %v487
        %v489 = vpop.f32.mrf.mxu0
        %v490 = vadd.f32 %v291, %v489
        %491 = vmatmul.bf16.gmra.mxu0 %v260
        %v492 = vpop.f32.mrf.mxu0
        %v493 = vadd.f32 %v291, %v492
        %v494 = vpop.f32.mrf.mxu0
        %v495 = vadd.f32 %v291, %v494
        %496 = vmatmul.bf16.gmra.mxu0 %v261
        %v497 = vpop.f32.mrf.mxu0
        %v498 = vadd.f32 %v291, %v497
        %v499 = vpop.f32.mrf.mxu0
        %v500 = vadd.f32 %v291, %v499
        %501 = vmatmul.bf16.gmra.mxu0 %v262
        %v502 = vpop.f32.mrf.mxu0
        %v503 = vadd.f32 %v291, %v502
        %v504 = vpop.f32.mrf.mxu0
        %v505 = vadd.f32 %v291, %v504
        %506 = vmatmul.bf16.gmra.mxu0 %v263
        %v507 = vpop.f32.mrf.mxu0
        %v508 = vadd.f32 %v291, %v507
        %v509 = vpop.f32.mrf.mxu0
        %v510 = vadd.f32 %v291, %v509
        %511 = vmatmul.bf16.gmra.mxu0 %v264
        %v512 = vpop.f32.mrf.mxu0
        %v513 = vadd.f32 %v291, %v512
        %v514 = vpop.f32.mrf.mxu0
        %v515 = vadd.f32 %v291, %v514
        %516 = vmatmul.bf16.gmra.mxu0 %v265
        %v517 = vpop.f32.mrf.mxu0
        %v518 = vadd.f32 %v291, %v517
        %v519 = vpop.f32.mrf.mxu0
        %v520 = vadd.f32 %v291, %v519
        %521 = vmatmul.bf16.gmra.mxu0 %v266
        %v522 = vpop.f32.mrf.mxu0
        %v523 = vadd.f32 %v291, %v522
        %v524 = vpop.f32.mrf.mxu0
        %v525 = vadd.f32 %v291, %v524
        %526 = vmatmul.bf16.gmra.mxu0 %v267
        %v527 = vpop.f32.mrf.mxu0
        %v528 = vadd.f32 %v291, %v527
        %v529 = vpop.f32.mrf.mxu0
        %v530 = vadd.f32 %v291, %v529
        %531 = vmatmul.bf16.gmra.mxu0 %v268
        %v532 = vpop.f32.mrf.mxu0
        %v533 = vadd.f32 %v291, %v532
        %v534 = vpop.f32.mrf.mxu0
        %v535 = vadd.f32 %v291, %v534
        %536 = vmatmul.bf16.gmra.mxu0 %v269
        %v537 = vpop.f32.mrf.mxu0
        %v538 = vadd.f32 %v291, %v537
        %v539 = vpop.f32.mrf.mxu0
        %v540 = vadd.f32 %v291, %v539
        %541 = vmatmul.bf16.gmra.mxu0 %v270
        %v542 = vpop.f32.mrf.mxu0
        %v543 = vadd.f32 %v291, %v542
        %v544 = vpop.f32.mrf.mxu0
        %v545 = vadd.f32 %v291, %v544
        %546 = vmatmul.bf16.gmra.mxu0 %v271
        %v547 = vpop.f32.mrf.mxu0
        %v548 = vadd.f32 %v291, %v547
        %v549 = vpop.f32.mrf.mxu0
        %v550 = vadd.f32 %v291, %v549
        %551 = vdwg.mxu0
        %v552 = vxor.u32 %v384, 2147483648
        %v553 = vxor.u32 %v386, 2147483648
        %v554 = vxor.u32 %v389, 2147483648
        %v555 = vxor.u32 %v391, 2147483648
        %v556 = vxor.u32 %v394, 2147483648
        %v557 = vxor.u32 %v396, 2147483648
        %v558 = vxor.u32 %v399, 2147483648
        %v559 = vxor.u32 %v401, 2147483648
        %v560 = vxor.u32 %v404, 2147483648
        %v561 = vxor.u32 %v406, 2147483648
        %v562 = vxor.u32 %v409, 2147483648
        %v563 = vxor.u32 %v411, 2147483648
        %v564 = vxor.u32 %v414, 2147483648
        %v565 = vxor.u32 %v416, 2147483648
        %v566 = vxor.u32 %v419, 2147483648
        %v567 = vxor.u32 %v421, 2147483648
        %v568 = vxor.u32 %v424, 2147483648
        %v569 = vxor.u32 %v426, 2147483648
        %v570 = vxor.u32 %v429, 2147483648
        %v571 = vxor.u32 %v431, 2147483648
        %v572 = vxor.u32 %v434, 2147483648
        %v573 = vxor.u32 %v436, 2147483648
        %v574 = vxor.u32 %v439, 2147483648
        %v575 = vxor.u32 %v441, 2147483648
        %v576 = vxor.u32 %v444, 2147483648
        %v577 = vxor.u32 %v446, 2147483648
        %v578 = vxor.u32 %v449, 2147483648
        %v579 = vxor.u32 %v451, 2147483648
        %v580 = vxor.u32 %v454, 2147483648
        %v581 = vxor.u32 %v456, 2147483648
        %v582 = vxor.u32 %v459, 2147483648
        %v583 = vxor.u32 %v461, 2147483648
        %v584 = vmul.f32 %v552, 1.442695
        %v585 = vpow.pop %v584
        %v586 = vmul.f32 %v553, 1.442695
        %v587 = vpow.pop %v586
        %v588 = vmul.f32 %v554, 1.442695
        %v589 = vpow.pop %v588
        %v590 = vmul.f32 %v555, 1.442695
        %v591 = vpow.pop %v590
        %v592 = vmul.f32 %v556, 1.442695
        %v593 = vpow.pop %v592
        %v594 = vmul.f32 %v557, 1.442695
        %v595 = vpow.pop %v594
        %v596 = vmul.f32 %v558, 1.442695
        %v597 = vpow.pop %v596
        %v598 = vmul.f32 %v559, 1.442695
        %v599 = vpow.pop %v598
        %v600 = vmul.f32 %v560, 1.442695
        %v601 = vpow.pop %v600
        %v602 = vmul.f32 %v561, 1.442695
        %v603 = vpow.pop %v602
        %v604 = vmul.f32 %v562, 1.442695
        %v605 = vpow.pop %v604
        %v606 = vmul.f32 %v563, 1.442695
        %v607 = vpow.pop %v606
        %v608 = vmul.f32 %v564, 1.442695
        %v609 = vpow.pop %v608
        %v610 = vmul.f32 %v565, 1.442695
        %v611 = vpow.pop %v610
        %v612 = vmul.f32 %v566, 1.442695
        %v613 = vpow.pop %v612
        %v614 = vmul.f32 %v567, 1.442695
        %v615 = vpow.pop %v614
        %v616 = vmul.f32 %v568, 1.442695
        %v617 = vpow.pop %v616
        %v618 = vmul.f32 %v569, 1.442695
        %v619 = vpow.pop %v618
        %v620 = vmul.f32 %v570, 1.442695
        %v621 = vpow.pop %v620
        %v622 = vmul.f32 %v571, 1.442695
        %v623 = vpow.pop %v622
        %v624 = vmul.f32 %v572, 1.442695
        %v625 = vpow.pop %v624
        %v626 = vmul.f32 %v573, 1.442695
        %v627 = vpow.pop %v626
        %v628 = vmul.f32 %v574, 1.442695
        %v629 = vpow.pop %v628
        %v630 = vmul.f32 %v575, 1.442695
        %v631 = vpow.pop %v630
        %v632 = vmul.f32 %v576, 1.442695
        %v633 = vpow.pop %v632
        %v634 = vmul.f32 %v577, 1.442695
        %v635 = vpow.pop %v634
        %v636 = vmul.f32 %v578, 1.442695
        %v637 = vpow.pop %v636
        %v638 = vmul.f32 %v579, 1.442695
        %v639 = vpow.pop %v638
        %v640 = vmul.f32 %v580, 1.442695
        %v641 = vpow.pop %v640
        %v642 = vmul.f32 %v581, 1.442695
        %v643 = vpow.pop %v642
        %v644 = vmul.f32 %v582, 1.442695
        %v645 = vpow.pop %v644
        %v646 = vmul.f32 %v583, 1.442695
        %v647 = vpow.pop %v646
        %v648 = vadd.f32 %v585, 1.0
        %v649 = vadd.f32 %v587, 1.0
        %v650 = vadd.f32 %v589, 1.0
        %v651 = vadd.f32 %v591, 1.0
        %v652 = vadd.f32 %v593, 1.0
        %v653 = vadd.f32 %v595, 1.0
        %v654 = vadd.f32 %v597, 1.0
        %v655 = vadd.f32 %v599, 1.0
        %v656 = vadd.f32 %v601, 1.0
        %v657 = vadd.f32 %v603, 1.0
        %v658 = vadd.f32 %v605, 1.0
        %v659 = vadd.f32 %v607, 1.0
        %v660 = vadd.f32 %v609, 1.0
        %v661 = vadd.f32 %v611, 1.0
        %v662 = vadd.f32 %v613, 1.0
        %v663 = vadd.f32 %v615, 1.0
        %v664 = vadd.f32 %v617, 1.0
        %v665 = vadd.f32 %v619, 1.0
        %v666 = vadd.f32 %v621, 1.0
        %v667 = vadd.f32 %v623, 1.0
        %v668 = vadd.f32 %v625, 1.0
        %v669 = vadd.f32 %v627, 1.0
        %v670 = vadd.f32 %v629, 1.0
        %v671 = vadd.f32 %v631, 1.0
        %v672 = vadd.f32 %v633, 1.0
        %v673 = vadd.f32 %v635, 1.0
        %v674 = vadd.f32 %v637, 1.0
        %v675 = vadd.f32 %v639, 1.0
        %v676 = vadd.f32 %v641, 1.0
        %v677 = vadd.f32 %v643, 1.0
        %v678 = vadd.f32 %v645, 1.0
        %v679 = vadd.f32 %v647, 1.0
        %v680 = vrcp.pop %v648
        %v681 = vmul.f32 %v648, %v680
        %v682 = vsub.f32 1.0, %v681
        %v683 = vmul.f32 %v680, %v682
        %v684 = vadd.f32 %v680, %v683
        %vm685 = vweird.f32 %v648
        %vm686 = vweird.f32 %v680
        %vm687 = vmor %vm685, %vm686
        %v688 = vsel %vm687, %v680, %v684
        %v689 = vand.u32 2147483647, %v648
        %vm690 = vcmp.eq.f32.partialorder %v689, 8.507059e+37
        %v691 = vand.u32 %v648, 2147483648
        %v692 = vor.u32 1.1754944e-38, %v691
        %v693 = vsel %vm690, %v692, %v688
        %v694 = vmul.f32 1.0, %v693
        %v695 = vrcp.pop %v649
        %v696 = vmul.f32 %v649, %v695
        %v697 = vsub.f32 1.0, %v696
        %v698 = vmul.f32 %v695, %v697
        %v699 = vadd.f32 %v695, %v698
        %vm700 = vweird.f32 %v649
        %vm701 = vweird.f32 %v695
        %vm702 = vmor %vm700, %vm701
        %v703 = vsel %vm702, %v695, %v699
        %v704 = vand.u32 2147483647, %v649
        %vm705 = vcmp.eq.f32.partialorder %v704, 8.507059e+37
        %v706 = vand.u32 %v649, 2147483648
        %v707 = vor.u32 1.1754944e-38, %v706
        %v708 = vsel %vm705, %v707, %v703
        %v709 = vmul.f32 1.0, %v708
        %v710 = vrcp.pop %v650
        %v711 = vmul.f32 %v650, %v710
        %v712 = vsub.f32 1.0, %v711
        %v713 = vmul.f32 %v710, %v712
        %v714 = vadd.f32 %v710, %v713
        %vm715 = vweird.f32 %v650
        %vm716 = vweird.f32 %v710
        %vm717 = vmor %vm715, %vm716
        %v718 = vsel %vm717, %v710, %v714
        %v719 = vand.u32 2147483647, %v650
        %vm720 = vcmp.eq.f32.partialorder %v719, 8.507059e+37
        %v721 = vand.u32 %v650, 2147483648
        %v722 = vor.u32 1.1754944e-38, %v721
        %v723 = vsel %vm720, %v722, %v718
        %v724 = vmul.f32 1.0, %v723
        %v725 = vrcp.pop %v651
        %v726 = vmul.f32 %v651, %v725
        %v727 = vsub.f32 1.0, %v726
        %v728 = vmul.f32 %v725, %v727
        %v729 = vadd.f32 %v725, %v728
        %vm730 = vweird.f32 %v651
        %vm731 = vweird.f32 %v725
        %vm732 = vmor %vm730, %vm731
        %v733 = vsel %vm732, %v725, %v729
        %v734 = vand.u32 2147483647, %v651
        %vm735 = vcmp.eq.f32.partialorder %v734, 8.507059e+37
        %v736 = vand.u32 %v651, 2147483648
        %v737 = vor.u32 1.1754944e-38, %v736
        %v738 = vsel %vm735, %v737, %v733
        %v739 = vmul.f32 1.0, %v738
        %v740 = vrcp.pop %v652
        %v741 = vmul.f32 %v652, %v740
        %v742 = vsub.f32 1.0, %v741
        %v743 = vmul.f32 %v740, %v742
        %v744 = vadd.f32 %v740, %v743
        %vm745 = vweird.f32 %v652
        %vm746 = vweird.f32 %v740
        %vm747 = vmor %vm745, %vm746
        %v748 = vsel %vm747, %v740, %v744
        %v749 = vand.u32 2147483647, %v652
        %vm750 = vcmp.eq.f32.partialorder %v749, 8.507059e+37
        %v751 = vand.u32 %v652, 2147483648
        %v752 = vor.u32 1.1754944e-38, %v751
        %v753 = vsel %vm750, %v752, %v748
        %v754 = vmul.f32 1.0, %v753
        %v755 = vrcp.pop %v653
        %v756 = vmul.f32 %v653, %v755
        %v757 = vsub.f32 1.0, %v756
        %v758 = vmul.f32 %v755, %v757
        %v759 = vadd.f32 %v755, %v758
        %vm760 = vweird.f32 %v653
        %vm761 = vweird.f32 %v755
        %vm762 = vmor %vm760, %vm761
        %v763 = vsel %vm762, %v755, %v759
        %v764 = vand.u32 2147483647, %v653
        %vm765 = vcmp.eq.f32.partialorder %v764, 8.507059e+37
        %v766 = vand.u32 %v653, 2147483648
        %v767 = vor.u32 1.1754944e-38, %v766
        %v768 = vsel %vm765, %v767, %v763
        %v769 = vmul.f32 1.0, %v768
        %v770 = vrcp.pop %v654
        %v771 = vmul.f32 %v654, %v770
        %v772 = vsub.f32 1.0, %v771
        %v773 = vmul.f32 %v770, %v772
        %v774 = vadd.f32 %v770, %v773
        %vm775 = vweird.f32 %v654
        %vm776 = vweird.f32 %v770
        %vm777 = vmor %vm775, %vm776
        %v778 = vsel %vm777, %v770, %v774
        %v779 = vand.u32 2147483647, %v654
        %vm780 = vcmp.eq.f32.partialorder %v779, 8.507059e+37
        %v781 = vand.u32 %v654, 2147483648
        %v782 = vor.u32 1.1754944e-38, %v781
        %v783 = vsel %vm780, %v782, %v778
        %v784 = vmul.f32 1.0, %v783
        %v785 = vrcp.pop %v655
        %v786 = vmul.f32 %v655, %v785
        %v787 = vsub.f32 1.0, %v786
        %v788 = vmul.f32 %v785, %v787
        %v789 = vadd.f32 %v785, %v788
        %vm790 = vweird.f32 %v655
        %vm791 = vweird.f32 %v785
        %vm792 = vmor %vm790, %vm791
        %v793 = vsel %vm792, %v785, %v789
        %v794 = vand.u32 2147483647, %v655
        %vm795 = vcmp.eq.f32.partialorder %v794, 8.507059e+37
        %v796 = vand.u32 %v655, 2147483648
        %v797 = vor.u32 1.1754944e-38, %v796
        %v798 = vsel %vm795, %v797, %v793
        %v799 = vmul.f32 1.0, %v798
        %v800 = vrcp.pop %v656
        %v801 = vmul.f32 %v656, %v800
        %v802 = vsub.f32 1.0, %v801
        %v803 = vmul.f32 %v800, %v802
        %v804 = vadd.f32 %v800, %v803
        %vm805 = vweird.f32 %v656
        %vm806 = vweird.f32 %v800
        %vm807 = vmor %vm805, %vm806
        %v808 = vsel %vm807, %v800, %v804
        %v809 = vand.u32 2147483647, %v656
        %vm810 = vcmp.eq.f32.partialorder %v809, 8.507059e+37
        %v811 = vand.u32 %v656, 2147483648
        %v812 = vor.u32 1.1754944e-38, %v811
        %v813 = vsel %vm810, %v812, %v808
        %v814 = vmul.f32 1.0, %v813
        %v815 = vrcp.pop %v657
        %v816 = vmul.f32 %v657, %v815
        %v817 = vsub.f32 1.0, %v816
        %v818 = vmul.f32 %v815, %v817
        %v819 = vadd.f32 %v815, %v818
        %vm820 = vweird.f32 %v657
        %vm821 = vweird.f32 %v815
        %vm822 = vmor %vm820, %vm821
        %v823 = vsel %vm822, %v815, %v819
        %v824 = vand.u32 2147483647, %v657
        %vm825 = vcmp.eq.f32.partialorder %v824, 8.507059e+37
        %v826 = vand.u32 %v657, 2147483648
        %v827 = vor.u32 1.1754944e-38, %v826
        %v828 = vsel %vm825, %v827, %v823
        %v829 = vmul.f32 1.0, %v828
        %v830 = vrcp.pop %v658
        %v831 = vmul.f32 %v658, %v830
        %v832 = vsub.f32 1.0, %v831
        %v833 = vmul.f32 %v830, %v832
        %v834 = vadd.f32 %v830, %v833
        %vm835 = vweird.f32 %v658
        %vm836 = vweird.f32 %v830
        %vm837 = vmor %vm835, %vm836
        %v838 = vsel %vm837, %v830, %v834
        %v839 = vand.u32 2147483647, %v658
        %vm840 = vcmp.eq.f32.partialorder %v839, 8.507059e+37
        %v841 = vand.u32 %v658, 2147483648
        %v842 = vor.u32 1.1754944e-38, %v841
        %v843 = vsel %vm840, %v842, %v838
        %v844 = vmul.f32 1.0, %v843
        %v845 = vrcp.pop %v659
        %v846 = vmul.f32 %v659, %v845
        %v847 = vsub.f32 1.0, %v846
        %v848 = vmul.f32 %v845, %v847
        %v849 = vadd.f32 %v845, %v848
        %vm850 = vweird.f32 %v659
        %vm851 = vweird.f32 %v845
        %vm852 = vmor %vm850, %vm851
        %v853 = vsel %vm852, %v845, %v849
        %v854 = vand.u32 2147483647, %v659
        %vm855 = vcmp.eq.f32.partialorder %v854, 8.507059e+37
        %v856 = vand.u32 %v659, 2147483648
        %v857 = vor.u32 1.1754944e-38, %v856
        %v858 = vsel %vm855, %v857, %v853
        %v859 = vmul.f32 1.0, %v858
        %v860 = vrcp.pop %v660
        %v861 = vmul.f32 %v660, %v860
        %v862 = vsub.f32 1.0, %v861
        %v863 = vmul.f32 %v860, %v862
        %v864 = vadd.f32 %v860, %v863
        %vm865 = vweird.f32 %v660
        %vm866 = vweird.f32 %v860
        %vm867 = vmor %vm865, %vm866
        %v868 = vsel %vm867, %v860, %v864
        %v869 = vand.u32 2147483647, %v660
        %vm870 = vcmp.eq.f32.partialorder %v869, 8.507059e+37
        %v871 = vand.u32 %v660, 2147483648
        %v872 = vor.u32 1.1754944e-38, %v871
        %v873 = vsel %vm870, %v872, %v868
        %v874 = vmul.f32 1.0, %v873
        %v875 = vrcp.pop %v661
        %v876 = vmul.f32 %v661, %v875
        %v877 = vsub.f32 1.0, %v876
        %v878 = vmul.f32 %v875, %v877
        %v879 = vadd.f32 %v875, %v878
        %vm880 = vweird.f32 %v661
        %vm881 = vweird.f32 %v875
        %vm882 = vmor %vm880, %vm881
        %v883 = vsel %vm882, %v875, %v879
        %v884 = vand.u32 2147483647, %v661
        %vm885 = vcmp.eq.f32.partialorder %v884, 8.507059e+37
        %v886 = vand.u32 %v661, 2147483648
        %v887 = vor.u32 1.1754944e-38, %v886
        %v888 = vsel %vm885, %v887, %v883
        %v889 = vmul.f32 1.0, %v888
        %v890 = vrcp.pop %v662
        %v891 = vmul.f32 %v662, %v890
        %v892 = vsub.f32 1.0, %v891
        %v893 = vmul.f32 %v890, %v892
        %v894 = vadd.f32 %v890, %v893
        %vm895 = vweird.f32 %v662
        %vm896 = vweird.f32 %v890
        %vm897 = vmor %vm895, %vm896
        %v898 = vsel %vm897, %v890, %v894
        %v899 = vand.u32 2147483647, %v662
        %vm900 = vcmp.eq.f32.partialorder %v899, 8.507059e+37
        %v901 = vand.u32 %v662, 2147483648
        %v902 = vor.u32 1.1754944e-38, %v901
        %v903 = vsel %vm900, %v902, %v898
        %v904 = vmul.f32 1.0, %v903
        %v905 = vrcp.pop %v663
        %v906 = vmul.f32 %v663, %v905
        %v907 = vsub.f32 1.0, %v906
        %v908 = vmul.f32 %v905, %v907
        %v909 = vadd.f32 %v905, %v908
        %vm910 = vweird.f32 %v663
        %vm911 = vweird.f32 %v905
        %vm912 = vmor %vm910, %vm911
        %v913 = vsel %vm912, %v905, %v909
        %v914 = vand.u32 2147483647, %v663
        %vm915 = vcmp.eq.f32.partialorder %v914, 8.507059e+37
        %v916 = vand.u32 %v663, 2147483648
        %v917 = vor.u32 1.1754944e-38, %v916
        %v918 = vsel %vm915, %v917, %v913
        %v919 = vmul.f32 1.0, %v918
        %v920 = vrcp.pop %v664
        %v921 = vmul.f32 %v664, %v920
        %v922 = vsub.f32 1.0, %v921
        %v923 = vmul.f32 %v920, %v922
        %v924 = vadd.f32 %v920, %v923
        %vm925 = vweird.f32 %v664
        %vm926 = vweird.f32 %v920
        %vm927 = vmor %vm925, %vm926
        %v928 = vsel %vm927, %v920, %v924
        %v929 = vand.u32 2147483647, %v664
        %vm930 = vcmp.eq.f32.partialorder %v929, 8.507059e+37
        %v931 = vand.u32 %v664, 2147483648
        %v932 = vor.u32 1.1754944e-38, %v931
        %v933 = vsel %vm930, %v932, %v928
        %v934 = vmul.f32 1.0, %v933
        %v935 = vrcp.pop %v665
        %v936 = vmul.f32 %v665, %v935
        %v937 = vsub.f32 1.0, %v936
        %v938 = vmul.f32 %v935, %v937
        %v939 = vadd.f32 %v935, %v938
        %vm940 = vweird.f32 %v665
        %vm941 = vweird.f32 %v935
        %vm942 = vmor %vm940, %vm941
        %v943 = vsel %vm942, %v935, %v939
        %v944 = vand.u32 2147483647, %v665
        %vm945 = vcmp.eq.f32.partialorder %v944, 8.507059e+37
        %v946 = vand.u32 %v665, 2147483648
        %v947 = vor.u32 1.1754944e-38, %v946
        %v948 = vsel %vm945, %v947, %v943
        %v949 = vmul.f32 1.0, %v948
        %v950 = vrcp.pop %v666
        %v951 = vmul.f32 %v666, %v950
        %v952 = vsub.f32 1.0, %v951
        %v953 = vmul.f32 %v950, %v952
        %v954 = vadd.f32 %v950, %v953
        %vm955 = vweird.f32 %v666
        %vm956 = vweird.f32 %v950
        %vm957 = vmor %vm955, %vm956
        %v958 = vsel %vm957, %v950, %v954
        %v959 = vand.u32 2147483647, %v666
        %vm960 = vcmp.eq.f32.partialorder %v959, 8.507059e+37
        %v961 = vand.u32 %v666, 2147483648
        %v962 = vor.u32 1.1754944e-38, %v961
        %v963 = vsel %vm960, %v962, %v958
        %v964 = vmul.f32 1.0, %v963
        %v965 = vrcp.pop %v667
        %v966 = vmul.f32 %v667, %v965
        %v967 = vsub.f32 1.0, %v966
        %v968 = vmul.f32 %v965, %v967
        %v969 = vadd.f32 %v965, %v968
        %vm970 = vweird.f32 %v667
        %vm971 = vweird.f32 %v965
        %vm972 = vmor %vm970, %vm971
        %v973 = vsel %vm972, %v965, %v969
        %v974 = vand.u32 2147483647, %v667
        %vm975 = vcmp.eq.f32.partialorder %v974, 8.507059e+37
        %v976 = vand.u32 %v667, 2147483648
        %v977 = vor.u32 1.1754944e-38, %v976
        %v978 = vsel %vm975, %v977, %v973
        %v979 = vmul.f32 1.0, %v978
        %v980 = vrcp.pop %v668
        %v981 = vmul.f32 %v668, %v980
        %v982 = vsub.f32 1.0, %v981
        %v983 = vmul.f32 %v980, %v982
        %v984 = vadd.f32 %v980, %v983
        %vm985 = vweird.f32 %v668
        %vm986 = vweird.f32 %v980
        %vm987 = vmor %vm985, %vm986
        %v988 = vsel %vm987, %v980, %v984
        %v989 = vand.u32 2147483647, %v668
        %vm990 = vcmp.eq.f32.partialorder %v989, 8.507059e+37
        %v991 = vand.u32 %v668, 2147483648
        %v992 = vor.u32 1.1754944e-38, %v991
        %v993 = vsel %vm990, %v992, %v988
        %v994 = vmul.f32 1.0, %v993
        %v995 = vrcp.pop %v669
        %v996 = vmul.f32 %v669, %v995
        %v997 = vsub.f32 1.0, %v996
        %v998 = vmul.f32 %v995, %v997
        %v999 = vadd.f32 %v995, %v998
        %vm1000 = vweird.f32 %v669
        %vm1001 = vweird.f32 %v995
        %vm1002 = vmor %vm1000, %vm1001
        %v1003 = vsel %vm1002, %v995, %v999
        %v1004 = vand.u32 2147483647, %v669
        %vm1005 = vcmp.eq.f32.partialorder %v1004, 8.507059e+37
        %v1006 = vand.u32 %v669, 2147483648
        %v1007 = vor.u32 1.1754944e-38, %v1006
        %v1008 = vsel %vm1005, %v1007, %v1003
        %v1009 = vmul.f32 1.0, %v1008
        %v1010 = vrcp.pop %v670
        %v1011 = vmul.f32 %v670, %v1010
        %v1012 = vsub.f32 1.0, %v1011
        %v1013 = vmul.f32 %v1010, %v1012
        %v1014 = vadd.f32 %v1010, %v1013
        %vm1015 = vweird.f32 %v670
        %vm1016 = vweird.f32 %v1010
        %vm1017 = vmor %vm1015, %vm1016
        %v1018 = vsel %vm1017, %v1010, %v1014
        %v1019 = vand.u32 2147483647, %v670
        %vm1020 = vcmp.eq.f32.partialorder %v1019, 8.507059e+37
        %v1021 = vand.u32 %v670, 2147483648
        %v1022 = vor.u32 1.1754944e-38, %v1021
        %v1023 = vsel %vm1020, %v1022, %v1018
        %v1024 = vmul.f32 1.0, %v1023
        %v1025 = vrcp.pop %v671
        %v1026 = vmul.f32 %v671, %v1025
        %v1027 = vsub.f32 1.0, %v1026
        %v1028 = vmul.f32 %v1025, %v1027
        %v1029 = vadd.f32 %v1025, %v1028
        %vm1030 = vweird.f32 %v671
        %vm1031 = vweird.f32 %v1025
        %vm1032 = vmor %vm1030, %vm1031
        %v1033 = vsel %vm1032, %v1025, %v1029
        %v1034 = vand.u32 2147483647, %v671
        %vm1035 = vcmp.eq.f32.partialorder %v1034, 8.507059e+37
        %v1036 = vand.u32 %v671, 2147483648
        %v1037 = vor.u32 1.1754944e-38, %v1036
        %v1038 = vsel %vm1035, %v1037, %v1033
        %v1039 = vmul.f32 1.0, %v1038
        %v1040 = vrcp.pop %v672
        %v1041 = vmul.f32 %v672, %v1040
        %v1042 = vsub.f32 1.0, %v1041
        %v1043 = vmul.f32 %v1040, %v1042
        %v1044 = vadd.f32 %v1040, %v1043
        %vm1045 = vweird.f32 %v672
        %vm1046 = vweird.f32 %v1040
        %vm1047 = vmor %vm1045, %vm1046
        %v1048 = vsel %vm1047, %v1040, %v1044
        %v1049 = vand.u32 2147483647, %v672
        %vm1050 = vcmp.eq.f32.partialorder %v1049, 8.507059e+37
        %v1051 = vand.u32 %v672, 2147483648
        %v1052 = vor.u32 1.1754944e-38, %v1051
        %v1053 = vsel %vm1050, %v1052, %v1048
        %v1054 = vmul.f32 1.0, %v1053
        %v1055 = vrcp.pop %v673
        %v1056 = vmul.f32 %v673, %v1055
        %v1057 = vsub.f32 1.0, %v1056
        %v1058 = vmul.f32 %v1055, %v1057
        %v1059 = vadd.f32 %v1055, %v1058
        %vm1060 = vweird.f32 %v673
        %vm1061 = vweird.f32 %v1055
        %vm1062 = vmor %vm1060, %vm1061
        %v1063 = vsel %vm1062, %v1055, %v1059
        %v1064 = vand.u32 2147483647, %v673
        %vm1065 = vcmp.eq.f32.partialorder %v1064, 8.507059e+37
        %v1066 = vand.u32 %v673, 2147483648
        %v1067 = vor.u32 1.1754944e-38, %v1066
        %v1068 = vsel %vm1065, %v1067, %v1063
        %v1069 = vmul.f32 1.0, %v1068
        %v1070 = vrcp.pop %v674
        %v1071 = vmul.f32 %v674, %v1070
        %v1072 = vsub.f32 1.0, %v1071
        %v1073 = vmul.f32 %v1070, %v1072
        %v1074 = vadd.f32 %v1070, %v1073
        %vm1075 = vweird.f32 %v674
        %vm1076 = vweird.f32 %v1070
        %vm1077 = vmor %vm1075, %vm1076
        %v1078 = vsel %vm1077, %v1070, %v1074
        %v1079 = vand.u32 2147483647, %v674
        %vm1080 = vcmp.eq.f32.partialorder %v1079, 8.507059e+37
        %v1081 = vand.u32 %v674, 2147483648
        %v1082 = vor.u32 1.1754944e-38, %v1081
        %v1083 = vsel %vm1080, %v1082, %v1078
        %v1084 = vmul.f32 1.0, %v1083
        %v1085 = vrcp.pop %v675
        %v1086 = vmul.f32 %v675, %v1085
        %v1087 = vsub.f32 1.0, %v1086
        %v1088 = vmul.f32 %v1085, %v1087
        %v1089 = vadd.f32 %v1085, %v1088
        %vm1090 = vweird.f32 %v675
        %vm1091 = vweird.f32 %v1085
        %vm1092 = vmor %vm1090, %vm1091
        %v1093 = vsel %vm1092, %v1085, %v1089
        %v1094 = vand.u32 2147483647, %v675
        %vm1095 = vcmp.eq.f32.partialorder %v1094, 8.507059e+37
        %v1096 = vand.u32 %v675, 2147483648
        %v1097 = vor.u32 1.1754944e-38, %v1096
        %v1098 = vsel %vm1095, %v1097, %v1093
        %v1099 = vmul.f32 1.0, %v1098
        %v1100 = vrcp.pop %v676
        %v1101 = vmul.f32 %v676, %v1100
        %v1102 = vsub.f32 1.0, %v1101
        %v1103 = vmul.f32 %v1100, %v1102
        %v1104 = vadd.f32 %v1100, %v1103
        %vm1105 = vweird.f32 %v676
        %vm1106 = vweird.f32 %v1100
        %vm1107 = vmor %vm1105, %vm1106
        %v1108 = vsel %vm1107, %v1100, %v1104
        %v1109 = vand.u32 2147483647, %v676
        %vm1110 = vcmp.eq.f32.partialorder %v1109, 8.507059e+37
        %v1111 = vand.u32 %v676, 2147483648
        %v1112 = vor.u32 1.1754944e-38, %v1111
        %v1113 = vsel %vm1110, %v1112, %v1108
        %v1114 = vmul.f32 1.0, %v1113
        %v1115 = vrcp.pop %v677
        %v1116 = vmul.f32 %v677, %v1115
        %v1117 = vsub.f32 1.0, %v1116
        %v1118 = vmul.f32 %v1115, %v1117
        %v1119 = vadd.f32 %v1115, %v1118
        %vm1120 = vweird.f32 %v677
        %vm1121 = vweird.f32 %v1115
        %vm1122 = vmor %vm1120, %vm1121
        %v1123 = vsel %vm1122, %v1115, %v1119
        %v1124 = vand.u32 2147483647, %v677
        %vm1125 = vcmp.eq.f32.partialorder %v1124, 8.507059e+37
        %v1126 = vand.u32 %v677, 2147483648
        %v1127 = vor.u32 1.1754944e-38, %v1126
        %v1128 = vsel %vm1125, %v1127, %v1123
        %v1129 = vmul.f32 1.0, %v1128
        %v1130 = vrcp.pop %v678
        %v1131 = vmul.f32 %v678, %v1130
        %v1132 = vsub.f32 1.0, %v1131
        %v1133 = vmul.f32 %v1130, %v1132
        %v1134 = vadd.f32 %v1130, %v1133
        %vm1135 = vweird.f32 %v678
        %vm1136 = vweird.f32 %v1130
        %vm1137 = vmor %vm1135, %vm1136
        %v1138 = vsel %vm1137, %v1130, %v1134
        %v1139 = vand.u32 2147483647, %v678
        %vm1140 = vcmp.eq.f32.partialorder %v1139, 8.507059e+37
        %v1141 = vand.u32 %v678, 2147483648
        %v1142 = vor.u32 1.1754944e-38, %v1141
        %v1143 = vsel %vm1140, %v1142, %v1138
        %v1144 = vmul.f32 1.0, %v1143
        %v1145 = vrcp.pop %v679
        %v1146 = vmul.f32 %v679, %v1145
        %v1147 = vsub.f32 1.0, %v1146
        %v1148 = vmul.f32 %v1145, %v1147
        %v1149 = vadd.f32 %v1145, %v1148
        %vm1150 = vweird.f32 %v679
        %vm1151 = vweird.f32 %v1145
        %vm1152 = vmor %vm1150, %vm1151
        %v1153 = vsel %vm1152, %v1145, %v1149
        %v1154 = vand.u32 2147483647, %v679
        %vm1155 = vcmp.eq.f32.partialorder %v1154, 8.507059e+37
        %v1156 = vand.u32 %v679, 2147483648
        %v1157 = vor.u32 1.1754944e-38, %v1156
        %v1158 = vsel %vm1155, %v1157, %v1153
        %v1159 = vmul.f32 1.0, %v1158
        %v1160 = vmax.f32 %v473, 0.0
        %v1161 = vmax.f32 %v475, 0.0
        %v1162 = vmax.f32 %v478, 0.0
        %v1163 = vmax.f32 %v480, 0.0
        %v1164 = vmax.f32 %v483, 0.0
        %v1165 = vmax.f32 %v485, 0.0
        %v1166 = vmax.f32 %v488, 0.0
        %v1167 = vmax.f32 %v490, 0.0
        %v1168 = vmax.f32 %v493, 0.0
        %v1169 = vmax.f32 %v495, 0.0
        %v1170 = vmax.f32 %v498, 0.0
        %v1171 = vmax.f32 %v500, 0.0
        %v1172 = vmax.f32 %v503, 0.0
        %v1173 = vmax.f32 %v505, 0.0
        %v1174 = vmax.f32 %v508, 0.0
        %v1175 = vmax.f32 %v510, 0.0
        %v1176 = vmax.f32 %v513, 0.0
        %v1177 = vmax.f32 %v515, 0.0
        %v1178 = vmax.f32 %v518, 0.0
        %v1179 = vmax.f32 %v520, 0.0
        %v1180 = vmax.f32 %v523, 0.0
        %v1181 = vmax.f32 %v525, 0.0
        %v1182 = vmax.f32 %v528, 0.0
        %v1183 = vmax.f32 %v530, 0.0
        %v1184 = vmax.f32 %v533, 0.0
        %v1185 = vmax.f32 %v535, 0.0
        %v1186 = vmax.f32 %v538, 0.0
        %v1187 = vmax.f32 %v540, 0.0
        %v1188 = vmax.f32 %v543, 0.0
        %v1189 = vmax.f32 %v545, 0.0
        %v1190 = vmax.f32 %v548, 0.0
        %v1191 = vmax.f32 %v550, 0.0
        %v1192 = vsub.f32 %v1160, %v224
        %v1193 = vsub.f32 %v1161, %v225
        %v1194 = vsub.f32 %v1162, %v226
        %v1195 = vsub.f32 %v1163, %v227
        %v1196 = vsub.f32 %v1164, %v228
        %v1197 = vsub.f32 %v1165, %v229
        %v1198 = vsub.f32 %v1166, %v230
        %v1199 = vsub.f32 %v1167, %v231
        %v1200 = vsub.f32 %v1168, %v232
        %v1201 = vsub.f32 %v1169, %v233
        %v1202 = vsub.f32 %v1170, %v234
        %v1203 = vsub.f32 %v1171, %v235
        %v1204 = vsub.f32 %v1172, %v236
        %v1205 = vsub.f32 %v1173, %v237
        %v1206 = vsub.f32 %v1174, %v238
        %v1207 = vsub.f32 %v1175, %v239
        %v1208 = vsub.f32 %v1176, %v240
        %v1209 = vsub.f32 %v1177, %v241
        %v1210 = vsub.f32 %v1178, %v242
        %v1211 = vsub.f32 %v1179, %v243
        %v1212 = vsub.f32 %v1180, %v244
        %v1213 = vsub.f32 %v1181, %v245
        %v1214 = vsub.f32 %v1182, %v246
        %v1215 = vsub.f32 %v1183, %v247
        %v1216 = vsub.f32 %v1184, %v248
        %v1217 = vsub.f32 %v1185, %v249
        %v1218 = vsub.f32 %v1186, %v250
        %v1219 = vsub.f32 %v1187, %v251
        %v1220 = vsub.f32 %v1188, %v252
        %v1221 = vsub.f32 %v1189, %v253
        %v1222 = vsub.f32 %v1190, %v254
        %v1223 = vsub.f32 %v1191, %v255
        %v1224 = vmul.f32 %v694, %v1192
        %v1225 = vmul.f32 %v709, %v1193
        %v1226 = vmul.f32 %v724, %v1194
        %v1227 = vmul.f32 %v739, %v1195
        %v1228 = vmul.f32 %v754, %v1196
        %v1229 = vmul.f32 %v769, %v1197
        %v1230 = vmul.f32 %v784, %v1198
        %v1231 = vmul.f32 %v799, %v1199
        %v1232 = vmul.f32 %v814, %v1200
        %v1233 = vmul.f32 %v829, %v1201
        %v1234 = vmul.f32 %v844, %v1202
        %v1235 = vmul.f32 %v859, %v1203
        %v1236 = vmul.f32 %v874, %v1204
        %v1237 = vmul.f32 %v889, %v1205
        %v1238 = vmul.f32 %v904, %v1206
        %v1239 = vmul.f32 %v919, %v1207
        %v1240 = vmul.f32 %v934, %v1208
        %v1241 = vmul.f32 %v949, %v1209
        %v1242 = vmul.f32 %v964, %v1210
        %v1243 = vmul.f32 %v979, %v1211
        %v1244 = vmul.f32 %v994, %v1212
        %v1245 = vmul.f32 %v1009, %v1213
        %v1246 = vmul.f32 %v1024, %v1214
        %v1247 = vmul.f32 %v1039, %v1215
        %v1248 = vmul.f32 %v1054, %v1216
        %v1249 = vmul.f32 %v1069, %v1217
        %v1250 = vmul.f32 %v1084, %v1218
        %v1251 = vmul.f32 %v1099, %v1219
        %v1252 = vmul.f32 %v1114, %v1220
        %v1253 = vmul.f32 %v1129, %v1221
        %v1254 = vmul.f32 %v1144, %v1222
        %v1255 = vmul.f32 %v1159, %v1223
        %v1256 = vadd.f32 %v224, %v1224
        %v1257 = vadd.f32 %v225, %v1225
        %v1258 = vadd.f32 %v226, %v1226
        %v1259 = vadd.f32 %v227, %v1227
        %v1260 = vadd.f32 %v228, %v1228
        %v1261 = vadd.f32 %v229, %v1229
        %v1262 = vadd.f32 %v230, %v1230
        %v1263 = vadd.f32 %v231, %v1231
        %v1264 = vadd.f32 %v232, %v1232
        %v1265 = vadd.f32 %v233, %v1233
        %v1266 = vadd.f32 %v234, %v1234
        %v1267 = vadd.f32 %v235, %v1235
        %v1268 = vadd.f32 %v236, %v1236
        %v1269 = vadd.f32 %v237, %v1237
        %v1270 = vadd.f32 %v238, %v1238
        %v1271 = vadd.f32 %v239, %v1239
        %v1272 = vadd.f32 %v240, %v1240
        %v1273 = vadd.f32 %v241, %v1241
        %v1274 = vadd.f32 %v242, %v1242
        %v1275 = vadd.f32 %v243, %v1243
        %v1276 = vadd.f32 %v244, %v1244
        %v1277 = vadd.f32 %v245, %v1245
        %v1278 = vadd.f32 %v246, %v1246
        %v1279 = vadd.f32 %v247, %v1247
        %v1280 = vadd.f32 %v248, %v1248
        %v1281 = vadd.f32 %v249, %v1249
        %v1282 = vadd.f32 %v250, %v1250
        %v1283 = vadd.f32 %v251, %v1251
        %v1284 = vadd.f32 %v252, %v1252
        %v1285 = vadd.f32 %v253, %v1253
        %v1286 = vadd.f32 %v254, %v1254
        %v1287 = vadd.f32 %v255, %v1255
        %1288 = vst [vmem:[%s221] sm:$0xff] %v1256
        %1289 = vst [vmem:[%s221 + $0x8] sm:$0xff] %v1257
        %1290 = vst [vmem:[%s221 + $0x10] sm:$0xff] %v1258
        %1291 = vst [vmem:[%s221 + $0x18] sm:$0xff] %v1259
        %1292 = vst [vmem:[%s221 + $0x20] sm:$0xff] %v1260
        %1293 = vst [vmem:[%s221 + $0x28] sm:$0xff] %v1261
        %1294 = vst [vmem:[%s221 + $0x30] sm:$0xff] %v1262
        %1295 = vst [vmem:[%s221 + $0x38] sm:$0xff] %v1263
        %1296 = vst [vmem:[%s221 + $0x40] sm:$0xff] %v1264
        %1297 = vst [vmem:[%s221 + $0x48] sm:$0xff] %v1265
        %1298 = vst [vmem:[%s221 + $0x50] sm:$0xff] %v1266
        %1299 = vst [vmem:[%s221 + $0x58] sm:$0xff] %v1267
        %1300 = vst [vmem:[%s221 + $0x60] sm:$0xff] %v1268
        %1301 = vst [vmem:[%s221 + $0x68] sm:$0xff] %v1269
        %1302 = vst [vmem:[%s221 + $0x70] sm:$0xff] %v1270
        %1303 = vst [vmem:[%s221 + $0x78] sm:$0xff] %v1271
        %1304 = vst [vmem:[%s221 + $0x80] sm:$0xff] %v1272
        %1305 = vst [vmem:[%s221 + $0x88] sm:$0xff] %v1273
        %1306 = vst [vmem:[%s221 + $0x90] sm:$0xff] %v1274
        %1307 = vst [vmem:[%s221 + $0x98] sm:$0xff] %v1275
        %1308 = vst [vmem:[%s221 + $0xa0] sm:$0xff] %v1276
        %1309 = vst [vmem:[%s221 + $0xa8] sm:$0xff] %v1277
        %1310 = vst [vmem:[%s221 + $0xb0] sm:$0xff] %v1278
        %1311 = vst [vmem:[%s221 + $0xb8] sm:$0xff] %v1279
        %1312 = vst [vmem:[%s221 + $0xc0] sm:$0xff] %v1280
        %1313 = vst [vmem:[%s221 + $0xc8] sm:$0xff] %v1281
        %1314 = vst [vmem:[%s221 + $0xd0] sm:$0xff] %v1282
        %1315 = vst [vmem:[%s221 + $0xd8] sm:$0xff] %v1283
        %1316 = vst [vmem:[%s221 + $0xe0] sm:$0xff] %v1284
        %1317 = vst [vmem:[%s221 + $0xe8] sm:$0xff] %v1285
        %1318 = vst [vmem:[%s221 + $0xf0] sm:$0xff] %v1286
        %1319 = vst [vmem:[%s221 + $0xf8] sm:$0xff] %v1287
        %s1320 = sand.u32 %s97, 1
        %s1321 = scalar_lea.sflag [#allocation4], %s1320
        %s1322 = sand.u32 %s97, 1
        %s1323 = smul.addr %s1322, 256
        %s1324 = scalar_lea.vmem [#allocation8], %s1323
        // Predicated region
        $region45: #{tpu_custom_call.1} parent=31 // pred_check
          %p1325 = pneg %p107
        $region46: #{tpu_custom_call.1} parent=31 // pred_check_branch
          %1327 = sbr.rel (%p1325) target = $region48
        $region47: #{tpu_custom_call.1} parent=31 // pred_region
          %s1328 = smul.u32 32, %s21
          %1330 = vsyncadd %s1321, 0
          %s1331 = smul.addr %s1328, 8
          %s1332 = scalar_lea.hbm %s3, %s1331
          %s1333 = sshll.u32 %s1324, 4
          %s1334 = int_to_ptr.vmem [resolvable:$true] %s1333
          %s1335 = sshll.u32 %s1332, 4
          %s1336 = int_to_ptr.hbm [resolvable:$true] %s1335
          %1341 = dma.vmem_to_hbm [thread:$0]  %s1334, 4096, %s1336, %s1321, 128, 128, 8
        $region48: #{tpu_custom_call.1} parent=31 // pred_fallthru
          _
      $region32: #{tpu_custom_call.1} parent=5 // pred_fallthru
        _
      %p1342 = scmp.le.s32.totalorder 2, %s16
      // Predicated region
      $region49: #{tpu_custom_call.1} parent=5 // pred_check
        %p1343 = pneg %p1342
      $region50: #{tpu_custom_call.1} parent=5 // pred_check_branch
        %1345 = sbr.rel (%p1343) target = $region52
      $region51: #{tpu_custom_call.1} parent=5 // pred_region
        %s1346 = ssub.s32 %s16, 2
        // Predicated region
        $region53: #{tpu_custom_call.1} parent=51 // pred_check
          %p1347 = pneg %p113
        $region54: #{tpu_custom_call.1} parent=51 // pred_check_branch
          %1349 = sbr.rel (%p1347) target = $region56
        $region55: #{tpu_custom_call.1} parent=51 // pred_region
          %s1350 = sand.u32 %s98, 1
          %s1351 = scalar_lea.sflag [#allocation4], %s1350
          %s1352 = sand.u32 %s98, 1
          %s1353 = smul.addr %s1352, 256
          %s1354 = scalar_lea.vmem [#allocation8], %s1353
          %1356 = dma.done %s1351, 4096
        $region56: #{tpu_custom_call.1} parent=51 // pred_fallthru
          _
      $region52: #{tpu_custom_call.1} parent=5 // pred_fallthru
        _
    $region6: #{tpu_custom_call.1} parent=1 // loop_footer
      %s20 = sadd.s32 1, %s16
    $region7: #{tpu_custom_call.1} parent=1 // loop_footer_branch
      %15 = sbr.rel target = $region3
    $region8: #{tpu_custom_call.1} parent=1 // loop_exit
      _
    %1357 = vsyncpa [#allocation3], 1
    %s1358 = scalar_lea.sflag [#allocation3], 1
    %1359 = vsyncpa %s1358, 1
    %1360 = vsyncpa [#allocation6], 1
    %1361 = vsyncpa [#allocation4], 1
    %s1362 = scalar_lea.sflag [#allocation4], 1
    %1363 = vsyncpa %s1362, 1

</llo_original>
